<compile_context>
chip_gen: v6e
topology: v6e:2x2x1
jax: 0.10.0
libtpu: 0.0.40
codegen_flags: <defaults>
</compile_context>

<pallas_src>
import math
import functools

import jax
import jax.numpy as jnp
from jax.experimental import pallas as pl
from jax.experimental.pallas import tpu as pltpu

_LANE = 128      # TPU lane width (last-dim tile)
_SUBLANE = 8     # TPU sublane width (second-to-last-dim tile)


def _round_up(x, m):
    return (x + m - 1) // m * m


def _fc_kernel(feat_ref, wT_ref, b_ref, out_ref):
    # feat_ref: [bm, fdim]   bf16
    # wT_ref:   [fdim, n_pad] bf16   (pre-transposed, lane-padded weight)
    # b_ref:    [1, n_pad]   f32
    # out_ref:  [bm, n_pad]  f32
    acc = jnp.dot(feat_ref[...], wT_ref[...], preferred_element_type=jnp.float32)
    out_ref[...] = acc + b_ref[...]


def prepare_fc_params(w, b):
    """One-time parameter prep (do this at load time, not per forward call).

    w: [num_class, fdim]  (PyTorch nn.Linear weight layout)
    b: [num_class]
    returns (wT_pad [fdim, n_pad] bf16, b_pad [1, n_pad] f32) with n_pad = ceil(num_class/128)*128.
    """
    num_class, fdim = w.shape
    n_pad = _round_up(num_class, _LANE)
    wT_pad = jnp.zeros((fdim, n_pad), jnp.bfloat16).at[:, :num_class].set(
        w.T.astype(jnp.bfloat16))
    b_pad = jnp.zeros((1, n_pad), jnp.float32).at[:, :num_class].set(
        b.astype(jnp.float32))
    return wT_pad, b_pad


@functools.partial(jax.jit, static_argnames=("num_class", "block_m"))
def net_head_forward(x_nchw, wT_pad, b_pad, *, num_class, block_m=256):
    """Pallas equivalent of: fc(flatten(x, start_dim=1)).

    x_nchw: [B, C, H, W] encoder output (any float dtype)
    wT_pad: [fdim, n_pad] bf16  (from prepare_fc_params)
    b_pad:  [1, n_pad]    f32   (from prepare_fc_params)
    returns [B, num_class] float32
    """
    B = x_nchw.shape[0]
    fdim = math.prod(x_nchw.shape[1:])
    n_pad = wT_pad.shape[1]
    assert wT_pad.shape[0] == fdim, (wT_pad.shape, fdim)
    assert num_class <= n_pad

    # glue: torch.flatten(x, start_dim=1); bf16 inputs to the MXU.
    feat = x_nchw.reshape(B, fdim).astype(jnp.bfloat16)

    # Batch tiling: bm multiple of 8 sublanes, capped at block_m; pad B up to a
    # multiple of bm so blocks are layout-legal and the grid is exact.
    bm = min(block_m, _round_up(B, _SUBLANE))
    b_padded = _round_up(B, bm)
    if b_padded != B:
        feat = jnp.pad(feat, ((0, b_padded - B), (0, 0)))
    grid_m = b_padded // bm

    cost = pl.CostEstimate(
        flops=2 * b_padded * fdim * n_pad,
        transcendentals=0,
        bytes_accessed=(b_padded * fdim * 2            # feat (bf16)
                        + fdim * n_pad * 2             # weight (bf16)
                        + n_pad * 4                    # bias (f32)
                        + b_padded * n_pad * 4),       # output (f32)
    )

    out = pl.pallas_call(
        _fc_kernel,
        out_shape=jax.ShapeDtypeStruct((b_padded, n_pad), jnp.float32),
        grid=(grid_m,),
        in_specs=[
            pl.BlockSpec((bm, fdim), lambda i: (i, 0)),     # feat: tiled over batch
            pl.BlockSpec((fdim, n_pad), lambda i: (0, 0)),  # weight: grid-invariant
            pl.BlockSpec((1, n_pad), lambda i: (0, 0)),     # bias: grid-invariant
        ],
        out_specs=pl.BlockSpec((bm, n_pad), lambda i: (i, 0)),
        compiler_params=pltpu.CompilerParams(
            dimension_semantics=("parallel",),
            vmem_limit_bytes=32 * 1024 * 1024,
        ),
        cost_estimate=cost,
    )(feat, wT_pad, b_pad)

    # Slice the lane-padded, batch-padded result back to the logical shape.
    return out[:B, :num_class]


if __name__ == "__main__":
    # Small, deterministic example consistent with arch='resnet18' -> fdim=512.
    B = 2
    fdim = 512
    num_class = 10

    key = jax.random.PRNGKey(0)
    kx, kw, kb = jax.random.split(key, 3)

    # Encoder output feature map (NCHW, spatial 1x1 after resnet18 avgpool).
    x = jax.random.normal(kx, (B, fdim, 1, 1), dtype=jnp.float32)

    # Deterministic nn.Linear(fdim, num_class) params (PyTorch-style uniform init).
    bound = 1.0 / (fdim ** 0.5)
    w = jax.random.uniform(kw, (num_class, fdim), jnp.float32, -bound, bound)
    b = jax.random.uniform(kb, (num_class,), jnp.float32, -bound, bound)

    # One-time param prep (pre-transpose + pad + bf16 cast).
    wT_pad, b_pad = prepare_fc_params(w, b)

    out = net_head_forward(x, wT_pad, b_pad, num_class=num_class)
    out = jax.block_until_ready(out)

    # Reference: same bf16-input / f32-accumulate semantics as the kernel.
    feat_f32 = x.reshape(B, fdim)
    ref = (feat_f32.astype(jnp.bfloat16).astype(jnp.float32)
           @ w.T.astype(jnp.bfloat16).astype(jnp.float32)) + b
    ref_f32 = feat_f32 @ w.T + b

    assert out.shape == (B, num_class)
    assert jnp.allclose(out, ref, atol=1e-2, rtol=1e-2)
    assert jnp.allclose(out, ref_f32, atol=5e-2, rtol=5e-2)

    print("KERNEL_OK")
</pallas_src>

<mosaic_0001>
module attributes {stable_mosaic.version = 11 : i64} {
  func.func @_fc_kernel(%arg0: i32, %arg1: memref<8x512xbf16, #tpu.memory_space<vmem>>, %arg2: memref<512x128xbf16, #tpu.memory_space<vmem>>, %arg3: memref<1x128xf32, #tpu.memory_space<vmem>>, %arg4: memref<8x128xf32, #tpu.memory_space<vmem>>) attributes {dimension_semantics = [#tpu.dimension_semantics<parallel>], iteration_bounds = array<i64: 1>, scalar_prefetch = 0 : i64, scratch_operands = 0 : i64, tpu.core_type = #tpu.core_type<tc>, window_params = [{transform_indices = @transform_0, window_bounds = array<i64: 8, 512>}, {pipeline_mode = #tpu.pipeline_mode<synchronous>, transform_indices = @transform_1, window_bounds = array<i64: 512, 128>}, {pipeline_mode = #tpu.pipeline_mode<synchronous>, transform_indices = @transform_2, window_bounds = array<i64: 1, 128>}, {transform_indices = @transform_3, window_bounds = array<i64: 8, 128>}]} {
    %c0 = arith.constant 0 : index
    %c0_0 = arith.constant 0 : index
    %0 = vector.load %arg1[%c0, %c0_0] : memref<8x512xbf16, #tpu.memory_space<vmem>>, vector<8x512xbf16>
    %c0_1 = arith.constant 0 : index
    %c0_2 = arith.constant 0 : index
    %1 = vector.load %arg2[%c0_1, %c0_2] : memref<512x128xbf16, #tpu.memory_space<vmem>>, vector<512x128xbf16>
    %cst = arith.constant dense<0.000000e+00> : vector<8x128xf32>
    %2 = tpu.matmul %0, %1, %cst {dimension_numbers = #tpu.dot_dimension_numbers<[1], [0], [0], [1], [0, 0, 1, 1], [], []>} : vector<8x512xbf16>, vector<512x128xbf16>, vector<8x128xf32> -> vector<8x128xf32>
    %c0_3 = arith.constant 0 : index
    %c0_4 = arith.constant 0 : index
    %3 = vector.load %arg3[%c0_3, %c0_4] : memref<1x128xf32, #tpu.memory_space<vmem>>, vector<1x128xf32>
    %4 = vector.broadcast %3 : vector<1x128xf32> to vector<8x128xf32>
    %5 = arith.addf %2, %4 : vector<8x128xf32>
    %c0_5 = arith.constant 0 : index
    %c0_6 = arith.constant 0 : index
    %6 = vector.load %arg4[%c0_5, %c0_6] : memref<8x128xf32, #tpu.memory_space<vmem>>, vector<8x128xf32>
    tpu.vector_store %arg4[%c0_5, %c0_6], %5 {strides = array<i32>} : memref<8x128xf32, #tpu.memory_space<vmem>>, vector<8x128xf32>,
    return
  }
  func.func @transform_0(%arg0: i32) -> (i32, i32) {
    %c0_i32 = arith.constant 0 : i32
    %c0_i32_0 = arith.constant 0 : i32
    return %arg0, %c0_i32 : i32, i32
  }
  func.func @transform_1(%arg0: i32) -> (i32, i32) {
    %c0_i32 = arith.constant 0 : i32
    %c0_i32_0 = arith.constant 0 : i32
    %c0_i32_1 = arith.constant 0 : i32
    return %c0_i32, %c0_i32_0 : i32, i32
  }
  func.func @transform_2(%arg0: i32) -> (i32, i32) {
    %c0_i32 = arith.constant 0 : i32
    %c0_i32_0 = arith.constant 0 : i32
    %c0_i32_1 = arith.constant 0 : i32
    return %c0_i32, %c0_i32_0 : i32, i32
  }
  func.func @transform_3(%arg0: i32) -> (i32, i32) {
    %c0_i32 = arith.constant 0 : i32
    %c0_i32_0 = arith.constant 0 : i32
    return %arg0, %c0_i32 : i32, i32
  }
}

</mosaic_0001>

<llo_original>
// kernel: net_head_forward.1
$region0: #{net_head_forward.1}
  #allocation0 [shape = 'u32[]', space=smem, size = 0x4, offset = 0x4, fixed_abs, tag = 'smem constant byte address 0x4 - core index']
  #allocation1 [shape = 'u32[144,128]{1,0:T(1,128)}', space=vmem, size = 0x12000, scoped, tag = 'internal scratch']
  %s0 = inlined_call_operand.vmem [shape: bf16[8,512], index: 0, kind: input, shape index: {}]
  %s1 = inlined_call_operand.hbm [shape: bf16[512,128], index: 1, kind: input, shape index: {}]
  %s2 = inlined_call_operand.vmem [shape: f32[1,128], index: 2, kind: input, shape index: {}]
  %s3 = inlined_call_operand.vmem [shape: f32[8,128], index: 3, kind: output, shape index: {}]
  %s4 = sld [smem:[#allocation0]]
  $region26: #{net_head_forward.1} parent=0
    _
  %s6 = ssub.s32 1, %s4
  %s7 = scalar_select 0, %s6, %s4
  $region1: #{net_head_forward.1} parent=0
    #allocation2 [shape = 'u8[131072]{0}', space=vmem, size = 0x20000, scoped, tag = 'input window, operand 1, single buffered']
    #allocation3 [shape = 's32[1]{0}', space=sflag, size = 0x4, scoped, tag = 'scoped memory for net_head_forward.1']
    %8 = vsyncpa [#allocation3], 0
    // Predicated region
    $region2: #{net_head_forward.1} parent=1 // pred_check
      _
    $region3: #{net_head_forward.1} parent=1 // pred_check_branch
      %10 = sbr.rel (0) target = $region5
    $region4: #{net_head_forward.1} parent=1 // pred_region
      _
    $region5: #{net_head_forward.1} parent=1 // pred_fallthru
      _
    // Predicated region
    $region6: #{net_head_forward.1} parent=1 // pred_check
      _
    $region7: #{net_head_forward.1} parent=1 // pred_check_branch
      %12 = sbr.rel (0) target = $region9
    $region8: #{net_head_forward.1} parent=1 // pred_region
      %s14 = ssub.s32 4096, 4096
      %15 = vsyncadd [#allocation3], %s14
      %s16 = sshll.u32 [#allocation2], 4
      %s17 = int_to_ptr.vmem [resolvable:$true] %s16
      %22 = dma.hbm_to_vmem [thread:$0]  %s1, 4096, %s17, [#allocation3], 64, 64, 4
    $region9: #{net_head_forward.1} parent=1 // pred_fallthru
      _
    // Predicated region
    $region10: #{net_head_forward.1} parent=1 // pred_check
      _
    $region11: #{net_head_forward.1} parent=1 // pred_check_branch
      %24 = sbr.rel (0) target = $region13
    $region12: #{net_head_forward.1} parent=1 // pred_region
      _
    $region13: #{net_head_forward.1} parent=1 // pred_fallthru
      _
    // Predicated region
    $region14: #{net_head_forward.1} parent=1 // pred_check
      _
    $region15: #{net_head_forward.1} parent=1 // pred_check_branch
      %26 = sbr.rel (0) target = $region17
    $region16: #{net_head_forward.1} parent=1 // pred_region
      %27 = dma.done [#allocation3], 4096
    $region17: #{net_head_forward.1} parent=1 // pred_fallthru
      _
    %v29 = vld [vmem:[%s0] sm:$0xff]
    %v30 = vld [vmem:[%s0 + $0x8] sm:$0xff]
    %v31 = vld [vmem:[#allocation2] sm:$0xf]
    %v32 = vld [vmem:[#allocation2 + $0x4] sm:$0xf]
    %v33 = vld [vmem:[#allocation2 + $0x8] sm:$0xf]
    %v34 = vld [vmem:[#allocation2 + $0xc] sm:$0xf]
    %v35 = vld [vmem:[#allocation2 + $0x10] sm:$0xf]
    %v36 = vld [vmem:[#allocation2 + $0x14] sm:$0xf]
    %v37 = vld [vmem:[#allocation2 + $0x18] sm:$0xf]
    %v38 = vld [vmem:[#allocation2 + $0x1c] sm:$0xf]
    %v39 = vld [vmem:[#allocation2 + $0x20] sm:$0xf]
    %v40 = vld [vmem:[#allocation2 + $0x24] sm:$0xf]
    %v41 = vld [vmem:[#allocation2 + $0x28] sm:$0xf]
    %v42 = vld [vmem:[#allocation2 + $0x2c] sm:$0xf]
    %v43 = vld [vmem:[#allocation2 + $0x30] sm:$0xf]
    %v44 = vld [vmem:[#allocation2 + $0x34] sm:$0xf]
    %v45 = vld [vmem:[#allocation2 + $0x38] sm:$0xf]
    %v46 = vld [vmem:[#allocation2 + $0x3c] sm:$0xf]
    %v47 = vld [vmem:[#allocation2 + $0x40] sm:$0xf]
    %v48 = vld [vmem:[#allocation2 + $0x44] sm:$0xf]
    %v49 = vld [vmem:[#allocation2 + $0x48] sm:$0xf]
    %v50 = vld [vmem:[#allocation2 + $0x4c] sm:$0xf]
    %v51 = vld [vmem:[#allocation2 + $0x50] sm:$0xf]
    %v52 = vld [vmem:[#allocation2 + $0x54] sm:$0xf]
    %v53 = vld [vmem:[#allocation2 + $0x58] sm:$0xf]
    %v54 = vld [vmem:[#allocation2 + $0x5c] sm:$0xf]
    %v55 = vld [vmem:[#allocation2 + $0x60] sm:$0xf]
    %v56 = vld [vmem:[#allocation2 + $0x64] sm:$0xf]
    %v57 = vld [vmem:[#allocation2 + $0x68] sm:$0xf]
    %v58 = vld [vmem:[#allocation2 + $0x6c] sm:$0xf]
    %v59 = vld [vmem:[#allocation2 + $0x70] sm:$0xf]
    %v60 = vld [vmem:[#allocation2 + $0x74] sm:$0xf]
    %v61 = vld [vmem:[#allocation2 + $0x78] sm:$0xf]
    %v62 = vld [vmem:[#allocation2 + $0x7c] sm:$0xf]
    %v63 = vld [vmem:[#allocation2 + $0x80] sm:$0xf]
    %v64 = vld [vmem:[#allocation2 + $0x84] sm:$0xf]
    %v65 = vld [vmem:[#allocation2 + $0x88] sm:$0xf]
    %v66 = vld [vmem:[#allocation2 + $0x8c] sm:$0xf]
    %v67 = vld [vmem:[#allocation2 + $0x90] sm:$0xf]
    %v68 = vld [vmem:[#allocation2 + $0x94] sm:$0xf]
    %v69 = vld [vmem:[#allocation2 + $0x98] sm:$0xf]
    %v70 = vld [vmem:[#allocation2 + $0x9c] sm:$0xf]
    %v71 = vld [vmem:[#allocation2 + $0xa0] sm:$0xf]
    %v72 = vld [vmem:[#allocation2 + $0xa4] sm:$0xf]
    %v73 = vld [vmem:[#allocation2 + $0xa8] sm:$0xf]
    %v74 = vld [vmem:[#allocation2 + $0xac] sm:$0xf]
    %v75 = vld [vmem:[#allocation2 + $0xb0] sm:$0xf]
    %v76 = vld [vmem:[#allocation2 + $0xb4] sm:$0xf]
    %v77 = vld [vmem:[#allocation2 + $0xb8] sm:$0xf]
    %v78 = vld [vmem:[#allocation2 + $0xbc] sm:$0xf]
    %v79 = vld [vmem:[#allocation2 + $0xc0] sm:$0xf]
    %v80 = vld [vmem:[#allocation2 + $0xc4] sm:$0xf]
    %v81 = vld [vmem:[#allocation2 + $0xc8] sm:$0xf]
    %v82 = vld [vmem:[#allocation2 + $0xcc] sm:$0xf]
    %v83 = vld [vmem:[#allocation2 + $0xd0] sm:$0xf]
    %v84 = vld [vmem:[#allocation2 + $0xd4] sm:$0xf]
    %v85 = vld [vmem:[#allocation2 + $0xd8] sm:$0xf]
    %v86 = vld [vmem:[#allocation2 + $0xdc] sm:$0xf]
    %v87 = vld [vmem:[#allocation2 + $0xe0] sm:$0xf]
    %v88 = vld [vmem:[#allocation2 + $0xe4] sm:$0xf]
    %v89 = vld [vmem:[#allocation2 + $0xe8] sm:$0xf]
    %v90 = vld [vmem:[#allocation2 + $0xec] sm:$0xf]
    %v91 = vld [vmem:[#allocation2 + $0xf0] sm:$0xf]
    %v92 = vld [vmem:[#allocation2 + $0xf4] sm:$0xf]
    %v93 = vld [vmem:[#allocation2 + $0xf8] sm:$0xf]
    %v94 = vld [vmem:[#allocation2 + $0xfc] sm:$0xf]
    %v95 = vld [vmem:[%s2] sm:$0x1]
    %v97 = vlaneseq
    %v98 = vshrl.u32 %v97, 7
    %v99 = vsub.s32 0, %v98
    %v100 = vrot.slane %v95, %v99
    %v104 = vunpack.c.l.b16 %v29
    %v105 = vunpack.c.h.b16 %v29
    %v106 = vunpack.c.l.b16 %v30
    %v107 = vunpack.c.h.b16 %v30
    %v108 = vpack.c.b16 %v104, %v104
    %v109 = vpack.c.b16 %v105, %v105
    %v110 = vpack.c.b16 %v106, %v106
    %v111 = vpack.c.b16 %v107, %v107
    %v180 = vunpack.c.l.b16 %v31
    %v181 = vunpack.c.l.b16 %v32
    %v182 = vunpack.c.l.b16 %v33
    %v183 = vunpack.c.l.b16 %v34
    %v184 = vunpack.c.l.b16 %v35
    %v185 = vunpack.c.l.b16 %v36
    %v186 = vunpack.c.l.b16 %v37
    %v187 = vunpack.c.l.b16 %v38
    %v188 = vunpack.c.l.b16 %v39
    %v189 = vunpack.c.l.b16 %v40
    %v190 = vunpack.c.l.b16 %v41
    %v191 = vunpack.c.l.b16 %v42
    %v192 = vunpack.c.l.b16 %v43
    %v193 = vunpack.c.l.b16 %v44
    %v194 = vunpack.c.l.b16 %v45
    %v195 = vunpack.c.l.b16 %v46
    %v196 = vunpack.c.l.b16 %v47
    %v197 = vunpack.c.l.b16 %v48
    %v198 = vunpack.c.l.b16 %v49
    %v199 = vunpack.c.l.b16 %v50
    %v200 = vunpack.c.l.b16 %v51
    %v201 = vunpack.c.l.b16 %v52
    %v202 = vunpack.c.l.b16 %v53
    %v203 = vunpack.c.l.b16 %v54
    %v204 = vunpack.c.l.b16 %v55
    %v205 = vunpack.c.l.b16 %v56
    %v206 = vunpack.c.l.b16 %v57
    %v207 = vunpack.c.l.b16 %v58
    %v208 = vunpack.c.l.b16 %v59
    %v209 = vunpack.c.l.b16 %v60
    %v210 = vunpack.c.l.b16 %v61
    %v211 = vunpack.c.l.b16 %v62
    %v212 = vunpack.c.l.b16 %v63
    %v213 = vunpack.c.l.b16 %v64
    %v214 = vunpack.c.l.b16 %v65
    %v215 = vunpack.c.l.b16 %v66
    %v216 = vunpack.c.l.b16 %v67
    %v217 = vunpack.c.l.b16 %v68
    %v218 = vunpack.c.l.b16 %v69
    %v219 = vunpack.c.l.b16 %v70
    %v220 = vunpack.c.l.b16 %v71
    %v221 = vunpack.c.l.b16 %v72
    %v222 = vunpack.c.l.b16 %v73
    %v223 = vunpack.c.l.b16 %v74
    %v224 = vunpack.c.l.b16 %v75
    %v225 = vunpack.c.l.b16 %v76
    %v226 = vunpack.c.l.b16 %v77
    %v227 = vunpack.c.l.b16 %v78
    %v228 = vunpack.c.l.b16 %v79
    %v229 = vunpack.c.l.b16 %v80
    %v230 = vunpack.c.l.b16 %v81
    %v231 = vunpack.c.l.b16 %v82
    %v232 = vunpack.c.l.b16 %v83
    %v233 = vunpack.c.l.b16 %v84
    %v234 = vunpack.c.l.b16 %v85
    %v235 = vunpack.c.l.b16 %v86
    %v236 = vunpack.c.l.b16 %v87
    %v237 = vunpack.c.l.b16 %v88
    %v238 = vunpack.c.l.b16 %v89
    %v239 = vunpack.c.l.b16 %v90
    %v240 = vunpack.c.l.b16 %v91
    %v241 = vunpack.c.l.b16 %v92
    %v242 = vunpack.c.l.b16 %v93
    %v243 = vunpack.c.l.b16 %v94
    %v244 = vpack.c.b16 %v181, %v180
    %v245 = vpack.c.b16 %v183, %v182
    %v246 = vpack.c.b16 %v185, %v184
    %v247 = vpack.c.b16 %v187, %v186
    %v248 = vpack.c.b16 %v189, %v188
    %v249 = vpack.c.b16 %v191, %v190
    %v250 = vpack.c.b16 %v193, %v192
    %v251 = vpack.c.b16 %v195, %v194
    %v252 = vpack.c.b16 %v197, %v196
    %v253 = vpack.c.b16 %v199, %v198
    %v254 = vpack.c.b16 %v201, %v200
    %v255 = vpack.c.b16 %v203, %v202
    %v256 = vpack.c.b16 %v205, %v204
    %v257 = vpack.c.b16 %v207, %v206
    %v258 = vpack.c.b16 %v209, %v208
    %v259 = vpack.c.b16 %v211, %v210
    %v260 = vpack.c.b16 %v213, %v212
    %v261 = vpack.c.b16 %v215, %v214
    %v262 = vpack.c.b16 %v217, %v216
    %v263 = vpack.c.b16 %v219, %v218
    %v264 = vpack.c.b16 %v221, %v220
    %v265 = vpack.c.b16 %v223, %v222
    %v266 = vpack.c.b16 %v225, %v224
    %v267 = vpack.c.b16 %v227, %v226
    %v268 = vpack.c.b16 %v229, %v228
    %v269 = vpack.c.b16 %v231, %v230
    %v270 = vpack.c.b16 %v233, %v232
    %v271 = vpack.c.b16 %v235, %v234
    %v272 = vpack.c.b16 %v237, %v236
    %v273 = vpack.c.b16 %v239, %v238
    %v274 = vpack.c.b16 %v241, %v240
    %v275 = vpack.c.b16 %v243, %v242
    %308 = vmatprep.subr.bf16.mxu0 0
    %309 = vmatpush1.bf16.msra.mxu0 %v251
    %310 = vmatprep.subr.bf16.mxu0 0
    %311 = vmatpush1.bf16.msra.mxu0 %v250
    %312 = vmatprep.subr.bf16.mxu0 0
    %313 = vmatpush1.bf16.msra.mxu0 %v249
    %314 = vmatprep.subr.bf16.mxu0 0
    %315 = vmatpush1.bf16.msra.mxu0 %v248
    %316 = vmatprep.subr.bf16.mxu0 0
    %317 = vmatpush1.bf16.msra.mxu0 %v247
    %318 = vmatprep.subr.bf16.mxu0 0
    %319 = vmatpush1.bf16.msra.mxu0 %v246
    %320 = vmatprep.subr.bf16.mxu0 0
    %321 = vmatpush1.bf16.msra.mxu0 %v245
    %322 = vmatprep.subr.bf16.mxu0 0
    %323 = vmatpush1.bf16.msra.mxu0 %v244
    %324 = vmatprep.subr.bf16.mxu0 0
    %325 = vmatpush2.bf16.msra.mxu0 %v259
    %326 = vmatprep.subr.bf16.mxu0 0
    %327 = vmatpush2.bf16.msra.mxu0 %v258
    %328 = vmatprep.subr.bf16.mxu0 0
    %329 = vmatpush2.bf16.msra.mxu0 %v257
    %330 = vmatprep.subr.bf16.mxu0 0
    %331 = vmatpush2.bf16.msra.mxu0 %v256
    %332 = vmatprep.subr.bf16.mxu0 0
    %333 = vmatpush2.bf16.msra.mxu0 %v255
    %334 = vmatprep.subr.bf16.mxu0 0
    %335 = vmatpush2.bf16.msra.mxu0 %v254
    %336 = vmatprep.subr.bf16.mxu0 0
    %337 = vmatpush2.bf16.msra.mxu0 %v253
    %338 = vmatprep.subr.bf16.mxu0 0
    %339 = vmatpush2.bf16.msra.mxu0 %v252
    %340 = vmatprep.mubr.bf16.mxu0 %v109
    %341 = vmatmul.mubr.bf16.gmra.mxu0 %v108
    %v342 = vpop.f32.mrf.mxu0
    %v343 = vadd.f32 %v100, %v342
    %v344 = vpop.f32.mrf.mxu0
    %v345 = vpop.f32.mrf.mxu0
    %v346 = vpop.f32.mrf.mxu0
    %347 = vdwg.mxu0
    %348 = vmatprep.subr.bf16.mxu0 0
    %349 = vmatpush1.bf16.msra.mxu0 %v267
    %350 = vmatprep.subr.bf16.mxu0 0
    %351 = vmatpush1.bf16.msra.mxu0 %v266
    %352 = vmatprep.subr.bf16.mxu0 0
    %353 = vmatpush1.bf16.msra.mxu0 %v265
    %354 = vmatprep.subr.bf16.mxu0 0
    %355 = vmatpush1.bf16.msra.mxu0 %v264
    %356 = vmatprep.subr.bf16.mxu0 0
    %357 = vmatpush1.bf16.msra.mxu0 %v263
    %358 = vmatprep.subr.bf16.mxu0 0
    %359 = vmatpush1.bf16.msra.mxu0 %v262
    %360 = vmatprep.subr.bf16.mxu0 0
    %361 = vmatpush1.bf16.msra.mxu0 %v261
    %362 = vmatprep.subr.bf16.mxu0 0
    %363 = vmatpush1.bf16.msra.mxu0 %v260
    %364 = vmatprep.subr.bf16.mxu0 0
    %365 = vmatpush2.bf16.msra.mxu0 %v275
    %366 = vmatprep.subr.bf16.mxu0 0
    %367 = vmatpush2.bf16.msra.mxu0 %v274
    %368 = vmatprep.subr.bf16.mxu0 0
    %369 = vmatpush2.bf16.msra.mxu0 %v273
    %370 = vmatprep.subr.bf16.mxu0 0
    %371 = vmatpush2.bf16.msra.mxu0 %v272
    %372 = vmatprep.subr.bf16.mxu0 0
    %373 = vmatpush2.bf16.msra.mxu0 %v271
    %374 = vmatprep.subr.bf16.mxu0 0
    %375 = vmatpush2.bf16.msra.mxu0 %v270
    %376 = vmatprep.subr.bf16.mxu0 0
    %377 = vmatpush2.bf16.msra.mxu0 %v269
    %378 = vmatprep.subr.bf16.mxu0 0
    %379 = vmatpush2.bf16.msra.mxu0 %v268
    %380 = vmatprep.mubr.bf16.mxu0 %v111
    %381 = vmatmul.mubr.bf16.gmra.mxu0 %v110
    %v382 = vpop.f32.mrf.mxu0
    %v383 = vadd.f32 %v343, %v382
    %v384 = vpop.f32.mrf.mxu0
    %v385 = vpop.f32.mrf.mxu0
    %v386 = vpop.f32.mrf.mxu0
    %387 = vdwg.mxu0
    %388 = vst [vmem:[%s3] sm:$0xff] %v383
    // Predicated region
    $region18: #{net_head_forward.1} parent=1 // pred_check
      _
    $region19: #{net_head_forward.1} parent=1 // pred_check_branch
      %390 = sbr.rel (0) target = $region21
    $region20: #{net_head_forward.1} parent=1 // pred_region
      _
    $region21: #{net_head_forward.1} parent=1 // pred_fallthru
      _
    // Predicated region
    $region22: #{net_head_forward.1} parent=1 // pred_check
      _
    $region23: #{net_head_forward.1} parent=1 // pred_check_branch
      %392 = sbr.rel (0) target = $region25
    $region24: #{net_head_forward.1} parent=1 // pred_region
      _
    $region25: #{net_head_forward.1} parent=1 // pred_fallthru
      _
    %393 = vsyncpa [#allocation3], 1

</llo_original>
